<compile_context>
chip_gen: v7x
topology: tpu7x:2x2x1
jax: 0.10.0
libtpu: 0.0.40
codegen_flags: <defaults>
</compile_context>

<pallas_src>
import functools
import numpy as np
import jax
import jax.numpy as jnp
from jax.experimental import pallas as pl
from jax.experimental.pallas import tpu as pltpu

# ----------------------------- config (small, deterministic) -----------------
BATCH = 2
SEQ_LEN = 16
EMBED = 32
N_VOCAB = 32          # padding_idx = N_VOCAB - 1 (embedding row zeroed)
NUM_FILTERS = 8
FILTER_SIZES = (2, 3, 4)
NUM_CLASSES = 4

# ---- packed parameter slab layout (8-sublane-aligned row offsets) -----------
_N_FILT = len(FILTER_SIZES)
_CONVB_ROW = 0                                  # rows 0..n-1 : conv biases (n, F)
_FCW_ROW = 8                                    # rows 8..8+n*F-1 : fc_w (n*F, C)
_FCB_ROW = _FCW_ROW + _N_FILT * NUM_FILTERS     # row 32 : fc_b (1, C)
_SLAB_ROWS = _FCB_ROW + 8                       # 40
_SLAB_COLS = max(NUM_FILTERS, NUM_CLASSES)      # 8


# ----------------------------- Pallas kernel ---------------------------------
def textcnn_kernel(filter_sizes, num_filters, num_classes,
                   tok_ref, wfold_ref, slab_ref, out_ref):
    """Fused (folded-)embed+conv -> relu -> time max-pool -> linear.

    tok_ref   : (B*S, 1) int32 token ids
    wfold_ref : (V, sum_k k*F) bf16   embedding-folded conv weights, columns
                ordered (filter k, shift j, out-channel f)
    slab_ref  : (_SLAB_ROWS, _SLAB_COLS) f32 packed {conv_b, fc_w, fc_b}
    out_ref   : (B, C) f32 logits
    """
    F = num_filters
    C = num_classes
    n = len(filter_sizes)

    B = out_ref.shape[0]
    BS = tok_ref.shape[0]
    S = BS // B
    V = wfold_ref.shape[0]

    # ---- one-hot directly in 2D (exact gather of folded-weight rows) --------
    tok = tok_ref[...]                                        # (B*S, 1) int32
    vocab_ids = jax.lax.broadcasted_iota(jnp.int32, (BS, V), 1)
    one_hot = (vocab_ids == tok).astype(jnp.bfloat16)         # (B*S, V)

    # ---- ONE wide MXU matmul covering all filter sizes and shifts -----------
    y = jnp.dot(one_hot, wfold_ref[...],
                preferred_element_type=jnp.float32)           # (B*S, n_cols) f32
    y3 = y.reshape(B, S, y.shape[-1])                         # leading-dim split only

    # ---- unpack the parameter slab (static, aligned slices) -----------------
    slab = slab_ref[...]                                      # (40, 8) f32
    conv_b = slab[_CONVB_ROW:_CONVB_ROW + n, :]               # (n, F_padded)
    fc_w = slab[_FCW_ROW:_FCW_ROW + n * F, 0:C]               # (n*F, C)
    fc_b = slab[_FCB_ROW:_FCB_ROW + 1, 0:C]                   # (1, C)

    # ---- per filter size: shift-add, max over time, bias + relu -------------
    feats = []
    off = 0
    for idx, k in enumerate(filter_sizes):
        T = S - k + 1
        acc = y3[:, 0:T, off:off + F]                         # shift j = 0
        for j in range(1, k):
            acc = acc + y3[:, j:j + T, off + j * F:off + (j + 1) * F]
        off += k * F
        # max-pool over time BEFORE bias+relu (exact: bias const over T,
        # relu monotone) -- avoids any (B,T,F) broadcast work.
        pooled = jnp.max(acc, axis=1)                         # (B, F)
        pooled = jnp.maximum(pooled + conv_b[idx:idx + 1, 0:F], 0.0)
        feats.append(pooled)

    # lane-pack pooled features and do ONE tiny FC matmul.
    feat = jnp.concatenate(feats, axis=-1)                    # (B, n*F)
    logits = jnp.dot(feat, fc_w, preferred_element_type=jnp.float32) + fc_b
    # TODO(synk): dropout is identity at inference (eval mode); no mask applied.
    out_ref[...] = logits.astype(out_ref.dtype)


# ----------------------------- wrapper ----------------------------------------
def textcnn_forward(tokens, params):
    """tokens: (B, S) int32.  Returns logits (B, NUM_CLASSES) float32."""
    B, S = tokens.shape
    n = len(FILTER_SIZES)

    # Fold the embedding table into the conv weights (per shift) and lane-pack
    # every (filter, shift) slab into ONE matrix; cast to bf16 for the MXU.
    cols = []
    for k in FILTER_SIZES:
        w = params[f'conv{k}_w']                              # (k, E, F)
        for j in range(k):
            cols.append(params['embedding'] @ w[j])           # (V, F) f32
    wfold = jnp.concatenate(cols, axis=1).astype(jnp.bfloat16)  # (V, 9*F)

    # Pack the small f32 parameters into one 8-sublane-aligned slab (one DMA).
    conv_b = jnp.concatenate([params[f'conv{k}_b'] for k in FILTER_SIZES],
                             axis=0)                          # (n, F)
    slab = jnp.zeros((_SLAB_ROWS, _SLAB_COLS), jnp.float32)
    slab = slab.at[_CONVB_ROW:_CONVB_ROW + n, 0:NUM_FILTERS].set(conv_b)
    slab = slab.at[_FCW_ROW:_FCW_ROW + n * NUM_FILTERS,
                   0:NUM_CLASSES].set(params['fc_w'])
    slab = slab.at[_FCB_ROW:_FCB_ROW + 1, 0:NUM_CLASSES].set(params['fc_b'])

    tok2 = tokens.astype(jnp.int32).reshape(B * S, 1)         # pre-flattened on host

    vmem = pl.BlockSpec(memory_space=pltpu.MemorySpace.VMEM)
    out = pl.pallas_call(
        functools.partial(textcnn_kernel, FILTER_SIZES, NUM_FILTERS,
                          NUM_CLASSES),
        out_shape=jax.ShapeDtypeStruct((B, NUM_CLASSES), jnp.float32),
        in_specs=[vmem, vmem, vmem],
        out_specs=vmem,
    )(tok2, wfold, slab)
    return out


# ----------------------------- reference (pure JAX) ---------------------------
def textcnn_reference(tokens, params):
    emb = params['embedding'][tokens]                         # (B, S, E)
    pooled = []
    for k in FILTER_SIZES:
        w = params[f'conv{k}_w']                              # (k, E, F)
        b = params[f'conv{k}_b'][0]                           # (F,)
        T = emb.shape[1] - k + 1
        acc = jnp.zeros((emb.shape[0], T, w.shape[-1]), jnp.float32)
        for j in range(k):
            acc = acc + jnp.einsum('bte,ef->btf', emb[:, j:j + T, :], w[j])
        acc = jax.nn.relu(acc + b)
        pooled.append(jnp.max(acc, axis=1))
    feat = jnp.concatenate(pooled, axis=1)
    return feat @ params['fc_w'] + params['fc_b'][0]


# ----------------------------- parameter init --------------------------------
def init_params(key):
    keys = jax.random.split(key, 3 + 2 * len(FILTER_SIZES))
    params = {}
    emb_table = 0.1 * jax.random.normal(keys[0], (N_VOCAB, EMBED), jnp.float32)
    emb_table = emb_table.at[N_VOCAB - 1].set(0.0)            # padding_idx row
    params['embedding'] = emb_table
    for i, k in enumerate(FILTER_SIZES):
        # PyTorch Conv2d weight is (F, 1, k, E); store as (k, E, F).
        params[f'conv{k}_w'] = 0.1 * jax.random.normal(
            keys[1 + 2 * i], (k, EMBED, NUM_FILTERS), jnp.float32)
        params[f'conv{k}_b'] = 0.1 * jax.random.normal(
            keys[2 + 2 * i], (1, NUM_FILTERS), jnp.float32)
    params['fc_w'] = 0.1 * jax.random.normal(
        keys[-2], (NUM_FILTERS * len(FILTER_SIZES), NUM_CLASSES), jnp.float32)
    params['fc_b'] = 0.1 * jax.random.normal(
        keys[-1], (1, NUM_CLASSES), jnp.float32)
    return params


if __name__ == "__main__":
    root = jax.random.PRNGKey(0)
    k_tok, k_par = jax.random.split(root)
    params = init_params(k_par)
    tokens = jax.random.randint(k_tok, (BATCH, SEQ_LEN), 0, N_VOCAB,
                                dtype=jnp.int32)

    out = textcnn_forward(tokens, params)
    out = jax.block_until_ready(out)

    ref = jax.block_until_ready(textcnn_reference(tokens, params))
    np.testing.assert_allclose(np.asarray(out), np.asarray(ref),
                               rtol=1e-2, atol=1e-2)
    print("KERNEL_OK")
</pallas_src>

<mosaic_0001>
module attributes {stable_mosaic.version = 11 : i64} {
  func.func @textcnn_kernel(%arg0: memref<32x1xi32, #tpu.memory_space<vmem>>, %arg1: memref<32x72xbf16, #tpu.memory_space<vmem>>, %arg2: memref<40x8xf32, #tpu.memory_space<vmem>>, %arg3: memref<2x4xf32, #tpu.memory_space<vmem>>) attributes {dimension_semantics = [], scalar_prefetch = 0 : i64, scratch_operands = 0 : i64, tpu.core_type = #tpu.core_type<tc>} {
    %c0 = arith.constant 0 : index
    %c0_0 = arith.constant 0 : index
    %0 = vector.load %arg0[%c0, %c0_0] : memref<32x1xi32, #tpu.memory_space<vmem>>, vector<32x1xi32>
    %1 = tpu.iota {dimensions = array<i32: 1>} : vector<32x32xi32>
    %2 = vector.broadcast %0 : vector<32x1xi32> to vector<32x32xi32>
    %3 = arith.cmpi eq, %1, %2 : vector<32x32xi32>
    %4 = arith.extui %3 : vector<32x32xi1> to vector<32x32xi32>
    %5 = arith.sitofp %4 : vector<32x32xi32> to vector<32x32xf32>
    %6 = arith.truncf %5 : vector<32x32xf32> to vector<32x32xbf16>
    %c0_1 = arith.constant 0 : index
    %c0_2 = arith.constant 0 : index
    %7 = vector.load %arg1[%c0_1, %c0_2] : memref<32x72xbf16, #tpu.memory_space<vmem>>, vector<32x72xbf16>
    %cst = arith.constant dense<0.000000e+00> : vector<32x72xf32>
    %8 = tpu.matmul %6, %7, %cst {dimension_numbers = #tpu.dot_dimension_numbers<[1], [0], [0], [1], [0, 0, 1, 1], [], []>} : vector<32x32xbf16>, vector<32x72xbf16>, vector<32x72xf32> -> vector<32x72xf32>
    %9 = vector.shape_cast %8 : vector<32x72xf32> to vector<2x16x72xf32>
    %c0_3 = arith.constant 0 : index
    %c0_4 = arith.constant 0 : index
    %10 = vector.load %arg2[%c0_3, %c0_4] : memref<40x8xf32, #tpu.memory_space<vmem>>, vector<40x8xf32>
    %11 = vector.extract_strided_slice %10 {offsets = [0, 0], sizes = [3, 8], strides = [1, 1]} : vector<40x8xf32> to vector<3x8xf32>
    %12 = vector.extract_strided_slice %10 {offsets = [8, 0], sizes = [24, 4], strides = [1, 1]} : vector<40x8xf32> to vector<24x4xf32>
    %13 = vector.extract_strided_slice %10 {offsets = [32, 0], sizes = [1, 4], strides = [1, 1]} : vector<40x8xf32> to vector<1x4xf32>
    %14 = vector.extract_strided_slice %9 {offsets = [0, 0, 0], sizes = [2, 15, 8], strides = [1, 1, 1]} : vector<2x16x72xf32> to vector<2x15x8xf32>
    %15 = vector.extract_strided_slice %9 {offsets = [0, 1, 8], sizes = [2, 15, 8], strides = [1, 1, 1]} : vector<2x16x72xf32> to vector<2x15x8xf32>
    %16 = arith.addf %14, %15 : vector<2x15x8xf32>
    %cst_5 = arith.constant dense<0xFF800000> : vector<2x8xf32>
    %17 = vector.multi_reduction <maximumf>, %16, %cst_5 [1] : vector<2x15x8xf32> to vector<2x8xf32>
    %18 = vector.extract_strided_slice %11 {offsets = [0, 0], sizes = [1, 8], strides = [1, 1]} : vector<3x8xf32> to vector<1x8xf32>
    %19 = vector.broadcast %18 : vector<1x8xf32> to vector<2x8xf32>
    %20 = arith.addf %17, %19 : vector<2x8xf32>
    %cst_6 = arith.constant 0.000000e+00 : f32
    %21 = vector.broadcast %cst_6 : f32 to vector<2x8xf32>
    %22 = arith.maximumf %20, %21 : vector<2x8xf32>
    %23 = vector.extract_strided_slice %9 {offsets = [0, 0, 16], sizes = [2, 14, 8], strides = [1, 1, 1]} : vector<2x16x72xf32> to vector<2x14x8xf32>
    %24 = vector.extract_strided_slice %9 {offsets = [0, 1, 24], sizes = [2, 14, 8], strides = [1, 1, 1]} : vector<2x16x72xf32> to vector<2x14x8xf32>
    %25 = arith.addf %23, %24 : vector<2x14x8xf32>
    %26 = vector.extract_strided_slice %9 {offsets = [0, 2, 32], sizes = [2, 14, 8], strides = [1, 1, 1]} : vector<2x16x72xf32> to vector<2x14x8xf32>
    %27 = arith.addf %25, %26 : vector<2x14x8xf32>
    %cst_7 = arith.constant dense<0xFF800000> : vector<2x8xf32>
    %28 = vector.multi_reduction <maximumf>, %27, %cst_7 [1] : vector<2x14x8xf32> to vector<2x8xf32>
    %29 = vector.extract_strided_slice %11 {offsets = [1, 0], sizes = [1, 8], strides = [1, 1]} : vector<3x8xf32> to vector<1x8xf32>
    %30 = vector.broadcast %29 : vector<1x8xf32> to vector<2x8xf32>
    %31 = arith.addf %28, %30 : vector<2x8xf32>
    %cst_8 = arith.constant 0.000000e+00 : f32
    %32 = vector.broadcast %cst_8 : f32 to vector<2x8xf32>
    %33 = arith.maximumf %31, %32 : vector<2x8xf32>
    %34 = vector.extract_strided_slice %9 {offsets = [0, 0, 40], sizes = [2, 13, 8], strides = [1, 1, 1]} : vector<2x16x72xf32> to vector<2x13x8xf32>
    %35 = vector.extract_strided_slice %9 {offsets = [0, 1, 48], sizes = [2, 13, 8], strides = [1, 1, 1]} : vector<2x16x72xf32> to vector<2x13x8xf32>
    %36 = arith.addf %34, %35 : vector<2x13x8xf32>
    %37 = vector.extract_strided_slice %9 {offsets = [0, 2, 56], sizes = [2, 13, 8], strides = [1, 1, 1]} : vector<2x16x72xf32> to vector<2x13x8xf32>
    %38 = arith.addf %36, %37 : vector<2x13x8xf32>
    %39 = vector.extract_strided_slice %9 {offsets = [0, 3, 64], sizes = [2, 13, 8], strides = [1, 1, 1]} : vector<2x16x72xf32> to vector<2x13x8xf32>
    %40 = arith.addf %38, %39 : vector<2x13x8xf32>
    %cst_9 = arith.constant dense<0xFF800000> : vector<2x8xf32>
    %41 = vector.multi_reduction <maximumf>, %40, %cst_9 [1] : vector<2x13x8xf32> to vector<2x8xf32>
    %42 = vector.extract_strided_slice %11 {offsets = [2, 0], sizes = [1, 8], strides = [1, 1]} : vector<3x8xf32> to vector<1x8xf32>
    %43 = vector.broadcast %42 : vector<1x8xf32> to vector<2x8xf32>
    %44 = arith.addf %41, %43 : vector<2x8xf32>
    %cst_10 = arith.constant 0.000000e+00 : f32
    %45 = vector.broadcast %cst_10 : f32 to vector<2x8xf32>
    %46 = arith.maximumf %44, %45 : vector<2x8xf32>
    %47 = tpu.concatenate %22, %33, %46 in 1 : vector<2x8xf32>, vector<2x8xf32>, vector<2x8xf32> -> vector<2x24xf32>
    %cst_11 = arith.constant dense<0.000000e+00> : vector<2x4xf32>
    %48 = tpu.matmul %47, %12, %cst_11 {dimension_numbers = #tpu.dot_dimension_numbers<[1], [0], [0], [1], [0, 0, 1, 1], [], []>} : vector<2x24xf32>, vector<24x4xf32>, vector<2x4xf32> -> vector<2x4xf32>
    %49 = vector.broadcast %13 : vector<1x4xf32> to vector<2x4xf32>
    %50 = arith.addf %48, %49 : vector<2x4xf32>
    %c0_12 = arith.constant 0 : index
    %c0_13 = arith.constant 0 : index
    %51 = vector.load %arg3[%c0_12, %c0_13] : memref<2x4xf32, #tpu.memory_space<vmem>>, vector<2x4xf32>
    tpu.vector_store %arg3[%c0_12, %c0_13], %50 {strides = array<i32>} : memref<2x4xf32, #tpu.memory_space<vmem>>, vector<2x4xf32>,
    return
  }
}

</mosaic_0001>

<llo_original>
// kernel: tpu_custom_call.1
$region0: #{tpu_custom_call.1}
  #allocation0 [shape = 'u32[]', space=smem, size = 0x4, offset = 0x4, fixed_abs, tag = 'smem constant byte address 0x4 - core index']
  #allocation1 [shape = 'u32[144,128]{1,0:T(1,128)}', space=vmem, size = 0x12000, scoped, tag = 'internal scratch']
  %s0 = inlined_call_operand.vmem [shape: s32[32,1], index: 0, kind: input, shape index: {}]
  %s1 = inlined_call_operand.vmem [shape: bf16[32,72], index: 1, kind: input, shape index: {}]
  %s2 = inlined_call_operand.vmem [shape: f32[40,8], index: 2, kind: input, shape index: {}]
  %s3 = inlined_call_operand.hbm [shape: f32[2,4], index: 3, kind: output, shape index: {}]
  %s4 = sld [smem:[#allocation0]]
  $region22: #{tpu_custom_call.1} parent=0
    _
  %s6 = ssub.s32 1, %s4
  %s7 = scalar_select 0, %s6, %s4
  $region1: #{tpu_custom_call.1} parent=0
    #allocation2 [shape = 'u8[1024]{0}', space=vmem, size = 0x400, scoped, tag = 'output window, operand 0, single buffered']
    #allocation3 [shape = 's32[1]{0}', space=sflag, size = 0x4, scoped, tag = 'scoped memory for tpu_custom_call.1']
    %8 = vsyncpa [#allocation3], 0
    // Predicated region
    $region2: #{tpu_custom_call.1} parent=1 // pred_check
      _
    $region3: #{tpu_custom_call.1} parent=1 // pred_check_branch
      %10 = sbr.rel (0) target = $region5
    $region4: #{tpu_custom_call.1} parent=1 // pred_region
      _
    $region5: #{tpu_custom_call.1} parent=1 // pred_fallthru
      _
    // Predicated region
    $region6: #{tpu_custom_call.1} parent=1 // pred_check
      _
    $region7: #{tpu_custom_call.1} parent=1 // pred_check_branch
      %12 = sbr.rel (0) target = $region9
    $region8: #{tpu_custom_call.1} parent=1 // pred_region
      _
    $region9: #{tpu_custom_call.1} parent=1 // pred_fallthru
      _
    // Predicated region
    $region10: #{tpu_custom_call.1} parent=1 // pred_check
      _
    $region11: #{tpu_custom_call.1} parent=1 // pred_check_branch
      %14 = sbr.rel (0) target = $region13
    $region12: #{tpu_custom_call.1} parent=1 // pred_region
      _
    $region13: #{tpu_custom_call.1} parent=1 // pred_fallthru
      _
    %v16 = vld [vmem:[%s0] sm:$0xff]
    %v17 = vld [vmem:[%s0 + $0x8] sm:$0xff]
    %v18 = vld [vmem:[%s0 + $0x10] sm:$0xff]
    %v19 = vld [vmem:[%s0 + $0x18] sm:$0xff]
    %v20 = vlaneseq
    %v21 = vand.u32 %v20, 127
    %22 = vset.pattern.permute.xlu0 0
    %23 = vperm.xlu0 %22, %v16
    %v24 = vpop.permute.xlu0 %23
    %25 = vset.pattern.permute.xlu0 0
    %26 = vperm.xlu0 %25, %v17
    %v27 = vpop.permute.xlu0 %26
    %28 = vset.pattern.permute.xlu0 0
    %29 = vperm.xlu0 %28, %v18
    %v30 = vpop.permute.xlu0 %29
    %31 = vset.pattern.permute.xlu0 0
    %32 = vperm.xlu0 %31, %v19
    %v33 = vpop.permute.xlu0 %32
    %vm34 = vcmp.eq.s32.totalorder %v21, %v24
    %vm35 = vcmp.eq.s32.totalorder %v21, %v27
    %vm36 = vcmp.eq.s32.totalorder %v21, %v30
    %vm37 = vcmp.eq.s32.totalorder %v21, %v33
    %v38 = vsel %vm34, 1, 0
    %v39 = vsel %vm35, 1, 0
    %v40 = vsel %vm36, 1, 0
    %v41 = vsel %vm37, 1, 0
    %v42 = vcvt.s32.f32 %v38
    %v43 = vcvt.s32.f32 %v39
    %v44 = vcvt.s32.f32 %v40
    %v45 = vcvt.s32.f32 %v41
    %v46 = vpack.c.bf16 %v43, %v42
    %v47 = vpack.c.bf16 %v45, %v44
    %v48 = vld [vmem:[%s1] sm:$0xf]
    %v49 = vld [vmem:[%s1 + $0x4] sm:$0xf]
    %v50 = vld [vmem:[%s1 + $0x8] sm:$0xf]
    %v51 = vld [vmem:[%s1 + $0xc] sm:$0xf]
    %v56 = vunpack.c.l.b16 %v48
    %v57 = vunpack.c.l.b16 %v49
    %v58 = vunpack.c.l.b16 %v50
    %v59 = vunpack.c.l.b16 %v51
    %v60 = vpack.c.b16 %v57, %v56
    %v61 = vpack.c.b16 %v59, %v58
    %vm64 = vcmask 261120
    %v66 = vsel %vm64, %v46, 0
    %v69 = vsel %vm64, %v47, 0
    %71 = vmatprep.subr.bf16.mxu0 0
    %72 = vmatpush1.bf16.msra.mxu0 %v60
    %73 = vmatprep.subr.bf16.mxu0 0
    %74 = vmatpush1.bf16.msra.mxu0 %v61
    %75 = vmatprep.subr.bf16.mxu0 0
    %76 = vmatpush1.bf16.msra.mxu0 0
    %77 = vmatprep.subr.bf16.mxu0 0
    %78 = vmatpush1.bf16.msra.mxu0 0
    %79 = vmatprep.subr.bf16.mxu0 0
    %80 = vmatpush1.bf16.msra.mxu0 0
    %81 = vmatprep.subr.bf16.mxu0 0
    %82 = vmatpush1.bf16.msra.mxu0 0
    %83 = vmatprep.subr.bf16.mxu0 0
    %84 = vmatpush1.bf16.msra.mxu0 0
    %85 = vmatprep.subr.bf16.mxu0 0
    %86 = vmatpush1.bf16.msra.mxu0 0
    %87 = vmatprep.subr.bf16.mxu0 0
    %88 = vmatpush1.bf16.msra.mxu0 0
    %89 = vmatprep.subr.bf16.mxu0 0
    %90 = vmatpush1.bf16.msra.mxu0 0
    %91 = vmatprep.subr.bf16.mxu0 0
    %92 = vmatpush1.bf16.msra.mxu0 0
    %93 = vmatprep.subr.bf16.mxu0 0
    %94 = vmatpush1.bf16.msra.mxu0 0
    %95 = vmatprep.subr.bf16.mxu0 0
    %96 = vmatpush1.bf16.msra.mxu0 0
    %97 = vmatprep.subr.bf16.mxu0 0
    %98 = vmatpush1.bf16.msra.mxu0 0
    %99 = vmatprep.subr.bf16.mxu0 0
    %100 = vmatpush1.bf16.msra.mxu0 0
    %101 = vmatprep.subr.bf16.mxu0 0
    %102 = vmatpush1.bf16.msra.mxu0 0
    %103 = vmatprep.mubr.bf16.mxu0 0
    %104 = vmatmul.mubr.bf16.gmra.mrb[0].mxu0 %v66
    %v105 = vpop.f32.mrb[0].mxu0
    %v106 = vadd.f32 0.0, %v105
    %v107 = vpop.f32.mrb[0].mxu0
    %v108 = vpop.f32.mrb[0].mxu0
    %v109 = vadd.f32 0.0, %v108
    %v110 = vpop.f32.mrb[0].mxu0
    %111 = vmatprep.mubr.bf16.mxu0 0
    %112 = vmatmul.mubr.bf16.gmra.mrb[0].mxu0 %v69
    %v113 = vpop.f32.mrb[0].mxu0
    %v114 = vadd.f32 0.0, %v113
    %v115 = vpop.f32.mrb[0].mxu0
    %v116 = vpop.f32.mrb[0].mxu0
    %v117 = vadd.f32 0.0, %v116
    %v118 = vpop.f32.mrb[0].mxu0
    %119 = vdwg.mxu0
    %v120 = vld [vmem:[%s2] sm:$0xff]
    %v121 = vld [vmem:[%s2 + $0x8] sm:$0xff]
    %v122 = vld [vmem:[%s2 + $0x10] sm:$0xff]
    %v123 = vld [vmem:[%s2 + $0x18] sm:$0xff]
    %v124 = vld [vmem:[%s2 + $0x20] sm:$0xff]
    %vm129 = vcmask 1046528
    %v130 = vrot.slane %v106, 1
    %v131 = vrot.slane %v109, 1
    %v132 = vsel %vm129, %v130, %v131
    %v133 = vrot.slane %v114, 1
    %v134 = vrot.slane %v117, 1
    %v135 = vsel %vm129, %v133, %v134
    %136 = vrot.lane.b32.xlu0 %v132, 120
    %v137 = vpop.permute.xlu0 %136
    %138 = vrot.lane.b32.xlu0 %v131, 120
    %v139 = vpop.permute.xlu0 %138
    %140 = vrot.lane.b32.xlu0 %v135, 120
    %v141 = vpop.permute.xlu0 %140
    %142 = vrot.lane.b32.xlu0 %v134, 120
    %v143 = vpop.permute.xlu0 %142
    %v148 = vadd.f32 %v106, %v137
    %v149 = vadd.f32 %v109, %v139
    %v150 = vadd.f32 %v114, %v141
    %v151 = vadd.f32 %v117, %v143
    %vm152 = vcmask 64512
    %v153 = vsel %vm152, %v148, -inf
    %vm154 = vcmask 63488
    %v155 = vsel %vm154, %v149, -inf
    %v156 = vmax.f32 %v153, %v155
    %v157 = vrot.slane %v156, 4
    %v158 = vmax.f32 %v156, %v157
    %v159 = vrot.slane %v158, 2
    %v160 = vmax.f32 %v158, %v159
    %v161 = vrot.slane %v160, 1
    %v162 = vmax.f32 %v160, %v161
    %v163 = vsel %vm152, %v150, -inf
    %v164 = vsel %vm154, %v151, -inf
    %v165 = vmax.f32 %v163, %v164
    %v166 = vrot.slane %v165, 4
    %v167 = vmax.f32 %v165, %v166
    %v168 = vrot.slane %v167, 2
    %v169 = vmax.f32 %v167, %v168
    %v170 = vrot.slane %v169, 1
    %v171 = vmax.f32 %v169, %v170
    %v172 = vlaneseq
    %v173 = vshrl.u32 %v172, 7
    %v174 = vsub.s32 0, %v173
    %v175 = vrot.slane %v120, %v174
    %v176 = vadd.f32 %v162, %v175
    %v177 = vadd.f32 %v171, %v175
    %v178 = vmax.f32 %v176, 0.0
    %v179 = vmax.f32 %v177, 0.0
    %vm180 = vcmask 1045504
    %v181 = vrot.slane %v106, 2
    %v182 = vrot.slane %v109, 2
    %v183 = vsel %vm180, %v181, %v182
    %v184 = vrot.slane %v114, 2
    %v185 = vrot.slane %v117, 2
    %v186 = vsel %vm180, %v184, %v185
    %187 = vrot.lane.b32.xlu0 %v183, 112
    %v188 = vpop.permute.xlu0 %187
    %189 = vrot.lane.b32.xlu0 %v182, 112
    %v190 = vpop.permute.xlu0 %189
    %191 = vrot.lane.b32.xlu0 %v186, 112
    %v192 = vpop.permute.xlu0 %191
    %193 = vrot.lane.b32.xlu0 %v185, 112
    %v194 = vpop.permute.xlu0 %193
    %v199 = vadd.f32 %v148, %v188
    %v200 = vadd.f32 %v149, %v190
    %v201 = vadd.f32 %v150, %v192
    %v202 = vadd.f32 %v151, %v194
    %vm203 = vcmask 195712
    %v204 = vsel %vm203, %v199, -inf
    %vm205 = vcmask 193664
    %v206 = vsel %vm205, %v200, -inf
    %v207 = vmax.f32 %v204, %v206
    %v208 = vrot.slane %v207, 4
    %v209 = vmax.f32 %v207, %v208
    %v210 = vrot.slane %v209, 2
    %v211 = vmax.f32 %v209, %v210
    %v212 = vrot.slane %v211, 1
    %v213 = vmax.f32 %v211, %v212
    %v214 = vsel %vm203, %v201, -inf
    %v215 = vsel %vm205, %v202, -inf
    %v216 = vmax.f32 %v214, %v215
    %v217 = vrot.slane %v216, 4
    %v218 = vmax.f32 %v216, %v217
    %v219 = vrot.slane %v218, 2
    %v220 = vmax.f32 %v218, %v219
    %v221 = vrot.slane %v220, 1
    %v222 = vmax.f32 %v220, %v221
    %v223 = vlaneseq
    %v224 = vshrl.u32 %v223, 7
    %v225 = vsub.s32 1, %v224
    %v226 = vrot.slane %v120, %v225
    %228 = vrot.lane.b32.xlu0 %v226, 16
    %v229 = vpop.permute.xlu0 %228
    %v231 = vadd.f32 %v213, %v229
    %v232 = vadd.f32 %v222, %v229
    %v233 = vmax.f32 %v231, 0.0
    %v234 = vmax.f32 %v232, 0.0
    %vm235 = vcmask 1044480
    %v236 = vrot.slane %v106, 3
    %v237 = vrot.slane %v109, 3
    %v238 = vsel %vm235, %v236, %v237
    %v239 = vrot.slane %v114, 3
    %v240 = vrot.slane %v117, 3
    %v241 = vsel %vm235, %v239, %v240
    %242 = vrot.lane.b32.xlu0 %v238, 104
    %v243 = vpop.permute.xlu0 %242
    %244 = vrot.lane.b32.xlu0 %v237, 104
    %v245 = vpop.permute.xlu0 %244
    %246 = vrot.lane.b32.xlu0 %v241, 104
    %v247 = vpop.permute.xlu0 %246
    %248 = vrot.lane.b32.xlu0 %v240, 104
    %v249 = vpop.permute.xlu0 %248
    %v254 = vadd.f32 %v199, %v243
    %v255 = vadd.f32 %v200, %v245
    %v256 = vadd.f32 %v201, %v247
    %v257 = vadd.f32 %v202, %v249
    %vm258 = vcmask 392512
    %v259 = vsel %vm258, %v254, -inf
    %vm260 = vcmask 389440
    %v261 = vsel %vm260, %v255, -inf
    %v262 = vmax.f32 %v259, %v261
    %v263 = vrot.slane %v262, 4
    %v264 = vmax.f32 %v262, %v263
    %v265 = vrot.slane %v264, 2
    %v266 = vmax.f32 %v264, %v265
    %v267 = vrot.slane %v266, 1
    %v268 = vmax.f32 %v266, %v267
    %v269 = vsel %vm258, %v256, -inf
    %v270 = vsel %vm260, %v257, -inf
    %v271 = vmax.f32 %v269, %v270
    %v272 = vrot.slane %v271, 4
    %v273 = vmax.f32 %v271, %v272
    %v274 = vrot.slane %v273, 2
    %v275 = vmax.f32 %v273, %v274
    %v276 = vrot.slane %v275, 1
    %v277 = vmax.f32 %v275, %v276
    %v278 = vlaneseq
    %v279 = vshrl.u32 %v278, 7
    %v280 = vsub.s32 2, %v279
    %v281 = vrot.slane %v120, %v280
    %283 = vrot.lane.b32.xlu0 %v281, 40
    %v284 = vpop.permute.xlu0 %283
    %v286 = vadd.f32 %v268, %v284
    %v287 = vadd.f32 %v277, %v284
    %v288 = vmax.f32 %v286, 0.0
    %v289 = vmax.f32 %v287, 0.0
    %v292 = vrot.slane %v179, 7
    %vm293 = vcmask 1041409
    %v294 = vsel %vm293, %v292, %v178
    %v298 = vrot.slane %v234, 7
    %v299 = vsel %vm293, %v298, %v233
    %300 = vrot.lane.b32.xlu0 %v299, 120
    %v301 = vpop.permute.xlu0 %300
    %v305 = vrot.slane %v289, 7
    %v306 = vsel %vm293, %v305, %v288
    %307 = vrot.lane.b32.xlu0 %v306, 104
    %v308 = vpop.permute.xlu0 %307
    %v310 = vsel %vm152, %v294, %v301
    %vm311 = vcmask 130048
    %v312 = vsel %vm311, %v310, %v308
    %v313 = vlaneseq
    %v314 = vshrl.u32 %v313, 7
    %v315 = vsub.s32 0, %v314
    %v316 = vrot.slane %v124, %v315
    %vm317 = vcmask 195584
    %v319 = vsel %vm317, %v312, 0
    %321 = vmatprep.subr.mxu0 0.0
    %322 = vmatpush1.msra.mxu0 %v121
    %323 = vmatprep.subr.mxu0 0.0
    %324 = vmatpush1.msra.mxu0 %v122
    %325 = vmatprep.subr.mxu0 0.0
    %326 = vmatpush1.msra.mxu0 %v123
    %327 = vmatprep.subr.mxu0 0.0
    %328 = vmatpush1.msra.mxu0 0.0
    %329 = vmatprep.subr.mxu0 0.0
    %330 = vmatpush1.msra.mxu0 0.0
    %331 = vmatprep.subr.mxu0 0.0
    %332 = vmatpush1.msra.mxu0 0.0
    %333 = vmatprep.subr.mxu0 0.0
    %334 = vmatpush1.msra.mxu0 0.0
    %335 = vmatprep.subr.mxu0 0.0
    %336 = vmatpush1.msra.mxu0 0.0
    %337 = vmatprep.subr.mxu0 0.0
    %338 = vmatpush1.msra.mxu0 0.0
    %339 = vmatprep.subr.mxu0 0.0
    %340 = vmatpush1.msra.mxu0 0.0
    %341 = vmatprep.subr.mxu0 0.0
    %342 = vmatpush1.msra.mxu0 0.0
    %343 = vmatprep.subr.mxu0 0.0
    %344 = vmatpush1.msra.mxu0 0.0
    %345 = vmatprep.subr.mxu0 0.0
    %346 = vmatpush1.msra.mxu0 0.0
    %347 = vmatprep.subr.mxu0 0.0
    %348 = vmatpush1.msra.mxu0 0.0
    %349 = vmatprep.subr.mxu0 0.0
    %350 = vmatpush1.msra.mxu0 0.0
    %351 = vmatprep.subr.mxu0 0.0
    %352 = vmatpush1.msra.mxu0 0.0
    %353 = vmatprep.subr.mxu0 0.0
    %354 = vmatpush1.msra.mxu0 0.0
    %355 = vmatprep.subr.mxu0 0.0
    %356 = vmatpush1.msra.mxu0 0.0
    %357 = vmatprep.subr.mxu0 0.0
    %358 = vmatpush1.msra.mxu0 0.0
    %359 = vmatprep.subr.mxu0 0.0
    %360 = vmatpush1.msra.mxu0 0.0
    %361 = vmatprep.subr.mxu0 0.0
    %362 = vmatpush1.msra.mxu0 0.0
    %363 = vmatprep.subr.mxu0 0.0
    %364 = vmatpush1.msra.mxu0 0.0
    %365 = vmatprep.subr.mxu0 0.0
    %366 = vmatpush1.msra.mxu0 0.0
    %367 = vmatprep.subr.mxu0 0.0
    %368 = vmatpush1.msra.mxu0 0.0
    %369 = vmatprep.subr.mxu0 0.0
    %370 = vmatpush1.msra.mxu0 0.0
    %371 = vmatprep.subr.mxu0 0.0
    %372 = vmatpush1.msra.mxu0 0.0
    %373 = vmatprep.subr.mxu0 0.0
    %374 = vmatpush1.msra.mxu0 0.0
    %375 = vmatprep.subr.mxu0 0.0
    %376 = vmatpush1.msra.mxu0 0.0
    %377 = vmatprep.subr.mxu0 0.0
    %378 = vmatpush1.msra.mxu0 0.0
    %379 = vmatprep.subr.mxu0 0.0
    %380 = vmatpush1.msra.mxu0 0.0
    %381 = vmatprep.subr.mxu0 0.0
    %382 = vmatpush1.msra.mxu0 0.0
    %383 = vmatprep.subr.mxu0 0.0
    %384 = vmatpush1.msra.mxu0 0.0
    %385 = vmatprep.mubr.f32.mxu0 0.0
    %386 = vmatmul.mubr.f32.gmra.mrb[0].mxu0 %v319
    %v387 = vpop.f32.mrb[0].mxu0
    %v388 = vadd.f32 %v316, %v387
    %v389 = vpop.f32.mrb[0].mxu0
    %390 = vdwg.mxu0
    %vm391 = vcmask 25600
    %392 = vst.msk [vmem:[#allocation2] sm:$0x3] %vm391, %v388
    // Predicated region
    $region14: #{tpu_custom_call.1} parent=1 // pred_check
      _
    $region15: #{tpu_custom_call.1} parent=1 // pred_check_branch
      %394 = sbr.rel (0) target = $region17
    $region16: #{tpu_custom_call.1} parent=1 // pred_region
      %s396 = ssub.s32 32, 32
      %397 = vsyncadd [#allocation3], %s396
      %s399 = sshll.u32 [#allocation2], 4
      %s400 = int_to_ptr.vmem [resolvable:$true] %s399
      %402 = dma.vmem_to_hbm [thread:$0]  %s400, 32, %s3, [#allocation3]
    $region17: #{tpu_custom_call.1} parent=1 // pred_fallthru
      _
    // Predicated region
    $region18: #{tpu_custom_call.1} parent=1 // pred_check
      _
    $region19: #{tpu_custom_call.1} parent=1 // pred_check_branch
      %404 = sbr.rel (0) target = $region21
    $region20: #{tpu_custom_call.1} parent=1 // pred_region
      %405 = dma.done [#allocation3], 32
    $region21: #{tpu_custom_call.1} parent=1 // pred_fallthru
      _
    %406 = vsyncpa [#allocation3], 1

</llo_original>
